<compile_context>
chip_gen: v5e
topology: v5e:2x2
jax: 0.10.0
libtpu: 0.0.40
codegen_flags: <defaults>
</compile_context>

<pallas_src>
from functools import partial

import jax
import jax.numpy as jnp
from jax import lax
from jax.experimental import pallas as pl
from jax.experimental.pallas import tpu as pltpu

DIM_IN = 1000          # fc1 input features
BN_EPS = 1e-5          # torch.nn.BatchNorm1d default eps

# Default batch tile. Per-tile VMEM ~= 2 (double buffer) * 2048 rows * 1024
# padded lanes * 4 B ~= 17 MiB for f32 input -- fits the 32 MiB scoped limit
# below on v5e/v6e (128 MiB physical VMEM) and v7x (64 MiB physical per TC).
DEFAULT_TILE_B = 2048
VMEM_LIMIT_BYTES = 32 * 1024 * 1024   # explicit, safe on v5e / v6e / v7x


def _round_up(n, m):
    return ((n + m - 1) // m) * m


def _two_layer_linear_kernel(shift_ref, w_ref, x_ref, out_ref, *, precision):
    """One batch tile: relu( w_eff . x_tile^T + shift ).

    shift_ref : SMEM (1, 1) f32        -- fused Linear-bias + eval-BN shift
    w_ref     : VMEM (1, D)            -- fused weights (fc1.weight * bn scale),
                                          resident across grid steps
    x_ref     : VMEM (tile_b, D)       -- input tile at its native dtype
    out_ref   : VMEM (1, tile_b) f32   -- lane-dense result for this tile
    """
    # Lane-dense row-dot: (1, D) . (tile_b, D)^T -> (1, tile_b) on the MXU with
    # f32 accumulation. No in-kernel dtype cast: bf16 inputs feed the MXU
    # directly; the degenerate M=1 dimension costs nothing (kernel is HBM-bound).
    y = lax.dot_general(
        w_ref[...], x_ref[...],
        dimension_numbers=(((1,), (1,)), ((), ())),
        precision=precision,
        preferred_element_type=jnp.float32,
    )
    z = y + shift_ref[0, 0]                    # Linear bias + BatchNorm (eval), folded
    out_ref[...] = jnp.maximum(z, 0.0)         # ReLU, unmasked lane-dense store


def two_layer_linear_forward(x, fc_w, fc_b, bn_gamma, bn_beta, bn_mean, bn_var,
                             *, eps=BN_EPS, tile_b=DEFAULT_TILE_B):
    """Pallas forward of TwoLayerLinear (eval-mode BatchNorm, ReLU activation).

    x     : (B, 1000) float array (f32 or bf16; bf16 feeds the MXU directly)
    fc_w  : (1, 1000), fc_b: (1,)   -- torch fc1.weight / fc1.bias
    bn_*  : (1,) each               -- BatchNorm1d(1) gamma / beta / running stats
    Returns (B, 1) float32, matching the torch module's output shape.
    """
    B, D = x.shape
    assert D == fc_w.shape[-1]
    x_dtype = jnp.dtype(x.dtype)

    # Fold fc1 bias + eval-mode BatchNorm into a per-feature weight scale and a
    # single scalar shift (tiny host-side glue; the big tensor is untouched).
    scale = (bn_gamma.astype(jnp.float32) /
             jnp.sqrt(bn_var.astype(jnp.float32) + eps))                  # (1,)
    w_eff = (fc_w.astype(jnp.float32) * scale[:, None]).reshape(1, D)     # (1, D)
    shift = ((fc_b.astype(jnp.float32) - bn_mean.astype(jnp.float32)) * scale
             + bn_beta.astype(jnp.float32)).reshape(1, 1)                 # (1, 1)

    if x_dtype == jnp.dtype(jnp.bfloat16):
        # Feed the MXU bf16 directly (f32 accumulation); halves HBM bytes read.
        w_eff = w_eff.astype(jnp.bfloat16)
        precision = lax.Precision.DEFAULT
    else:
        precision = lax.Precision.HIGHEST     # keep f32 fidelity for K=1000 reduction

    # Batch tiling:
    #   * at most DEFAULT_TILE_B rows per step (VMEM ceiling, see above),
    #   * at most ceil(B/2) rounded to 128 -> >= 2 grid steps for big batches
    #     so both v7x TensorCores participate ("parallel" axis below),
    #   * at most round_up(B, 8) so tiny batches use a single full-array block.
    # Net effect: tile_b is either a multiple of 128 (lane-dense, layout-legal
    # output blocks) or >= B (single block == full array dims).
    tile_b = min(int(tile_b), _round_up(-(-B // 2), 128), _round_up(B, 8))
    tile_b = max(tile_b, 8)
    num_tiles = pl.cdiv(B, tile_b)
    b_pad = num_tiles * tile_b
    # NOTE: no host-side jnp.pad -- the ragged last input block is handled by
    # Pallas; its garbage rows only affect output lanes that are sliced off.

    cost = pl.CostEstimate(
        flops=2 * B * D,
        transcendentals=0,
        bytes_accessed=int(B * D * x_dtype.itemsize + b_pad * 4 + D * 4),
    )

    out = pl.pallas_call(
        partial(_two_layer_linear_kernel, precision=precision),
        out_shape=jax.ShapeDtypeStruct((1, b_pad), jnp.float32),
        grid=(num_tiles,),
        in_specs=[
            pl.BlockSpec(memory_space=pltpu.MemorySpace.SMEM),        # shift (1,1)
            pl.BlockSpec((1, D), lambda i: (0, 0)),                   # w_eff, resident
            pl.BlockSpec((tile_b, D), lambda i: (i, 0)),              # x tile, pipelined
        ],
        out_specs=pl.BlockSpec((1, tile_b), lambda i: (0, i)),        # lane-dense
        compiler_params=pltpu.CompilerParams(
            dimension_semantics=("parallel",),   # shard batch tiles across TCs (v7x)
            vmem_limit_bytes=VMEM_LIMIT_BYTES,
        ),
        cost_estimate=cost,
    )(shift, w_eff, x)

    # (1, b_pad) -> (B, 1); padded tail lanes (if any) are dropped here.
    return out.reshape(b_pad)[:B].reshape(B, 1)


if __name__ == "__main__":
    key = jax.random.PRNGKey(0)
    k_x, k_w, k_b, k_g, k_be, k_m, k_v, k_x2 = jax.random.split(key, 8)

    # Deterministic parameters (shapes mirror the torch module's state dict).
    fc_w = jax.random.normal(k_w, (1, DIM_IN), dtype=jnp.float32) / jnp.sqrt(DIM_IN)
    fc_b = 0.1 * jax.random.normal(k_b, (1,), dtype=jnp.float32)
    bn_gamma = 0.5 + jnp.abs(jax.random.normal(k_g, (1,), dtype=jnp.float32))
    bn_beta = 0.1 * jax.random.normal(k_be, (1,), dtype=jnp.float32)
    bn_mean = 0.1 * jax.random.normal(k_m, (1,), dtype=jnp.float32)
    bn_var = 0.5 + jnp.abs(jax.random.normal(k_v, (1,), dtype=jnp.float32))

    def reference(xx):
        # Pure-JAX reference (Linear -> eval BatchNorm1d -> ReLU).
        y = jnp.einsum("bd,od->bo", xx, fc_w,
                       precision=lax.Precision.HIGHEST) + fc_b
        z = (y - bn_mean) / jnp.sqrt(bn_var + BN_EPS) * bn_gamma + bn_beta
        return jnp.maximum(z, 0.0)

    # Test 1: small aligned batch.
    x8 = jax.random.normal(k_x, (8, DIM_IN), dtype=jnp.float32)
    out8 = jax.block_until_ready(
        two_layer_linear_forward(x8, fc_w, fc_b, bn_gamma, bn_beta, bn_mean, bn_var))
    assert out8.shape == (8, 1), out8.shape
    assert jnp.allclose(out8, reference(x8), atol=1e-3, rtol=1e-3)

    # Test 2: ragged batch (B not a multiple of 8) -- exercises the
    # partial-last-block path that replaced the host-side jnp.pad.
    x20 = jax.random.normal(k_x2, (20, DIM_IN), dtype=jnp.float32)
    out20 = jax.block_until_ready(
        two_layer_linear_forward(x20, fc_w, fc_b, bn_gamma, bn_beta, bn_mean, bn_var))
    assert out20.shape == (20, 1), out20.shape
    assert jnp.allclose(out20, reference(x20), atol=1e-3, rtol=1e-3)

    print("KERNEL_OK")
</pallas_src>

<mosaic_0001>
module attributes {stable_mosaic.version = 11 : i64} {
  func.func @_two_layer_linear_kernel(%arg0: i32, %arg1: memref<1x1xf32, #tpu.memory_space<smem>>, %arg2: memref<1x1000xf32, #tpu.memory_space<vmem>>, %arg3: memref<8x1000xf32, #tpu.memory_space<vmem>>, %arg4: memref<1x8xf32, #tpu.memory_space<vmem>>) attributes {dimension_semantics = [#tpu.dimension_semantics<parallel>], iteration_bounds = array<i64: 1>, scalar_prefetch = 0 : i64, scratch_operands = 0 : i64, tpu.core_type = #tpu.core_type<tc>, window_params = [{transform_indices = @transform_0, window_bounds = array<i64: 1, 1>}, {pipeline_mode = #tpu.pipeline_mode<synchronous>, transform_indices = @transform_1, window_bounds = array<i64: 1, 1000>}, {transform_indices = @transform_2, window_bounds = array<i64: 8, 1000>}, {transform_indices = @transform_3, window_bounds = array<i64: 1, 8>}]} {
    %c0 = arith.constant 0 : index
    %c0_0 = arith.constant 0 : index
    %0 = vector.load %arg2[%c0, %c0_0] : memref<1x1000xf32, #tpu.memory_space<vmem>>, vector<1x1000xf32>
    %c0_1 = arith.constant 0 : index
    %c0_2 = arith.constant 0 : index
    %1 = vector.load %arg3[%c0_1, %c0_2] : memref<8x1000xf32, #tpu.memory_space<vmem>>, vector<8x1000xf32>
    %cst = arith.constant dense<0.000000e+00> : vector<1x8xf32>
    %2 = tpu.matmul %0, %1, %cst {dimension_numbers = #tpu.dot_dimension_numbers<[1], [1], [0], [0], [0, 0, 1, 0], [], []>, precision = #tpu.contract_precision<fp32>} : vector<1x1000xf32>, vector<8x1000xf32>, vector<1x8xf32> -> vector<1x8xf32>
    %c0_3 = arith.constant 0 : index
    %c0_4 = arith.constant 0 : index
    %3 = memref.load %arg1[%c0_3, %c0_4] : memref<1x1xf32, #tpu.memory_space<smem>>
    %4 = vector.broadcast %3 : f32 to vector<1x8xf32>
    %5 = arith.addf %2, %4 : vector<1x8xf32>
    %cst_5 = arith.constant 0.000000e+00 : f32
    %6 = vector.broadcast %cst_5 : f32 to vector<1x8xf32>
    %7 = arith.maximumf %5, %6 : vector<1x8xf32>
    %c0_6 = arith.constant 0 : index
    %c0_7 = arith.constant 0 : index
    %8 = vector.load %arg4[%c0_6, %c0_7] : memref<1x8xf32, #tpu.memory_space<vmem>>, vector<1x8xf32>
    tpu.vector_store %arg4[%c0_6, %c0_7], %7 {strides = array<i32>} : memref<1x8xf32, #tpu.memory_space<vmem>>, vector<1x8xf32>,
    return
  }
  func.func @transform_0(%arg0: i32) -> (i32, i32) {
    %c0_i32 = arith.constant 0 : i32
    %c0_i32_0 = arith.constant 0 : i32
    %c0_i32_1 = arith.constant 0 : i32
    return %c0_i32, %c0_i32_0 : i32, i32
  }
  func.func @transform_1(%arg0: i32) -> (i32, i32) {
    %c0_i32 = arith.constant 0 : i32
    %c0_i32_0 = arith.constant 0 : i32
    %c0_i32_1 = arith.constant 0 : i32
    return %c0_i32, %c0_i32_0 : i32, i32
  }
  func.func @transform_2(%arg0: i32) -> (i32, i32) {
    %c0_i32 = arith.constant 0 : i32
    %c0_i32_0 = arith.constant 0 : i32
    return %arg0, %c0_i32 : i32, i32
  }
  func.func @transform_3(%arg0: i32) -> (i32, i32) {
    %c0_i32 = arith.constant 0 : i32
    %c0_i32_0 = arith.constant 0 : i32
    return %c0_i32, %arg0 : i32, i32
  }
}

</mosaic_0001>

<llo_original>
// kernel: tpu_custom_call.1
$region0: #{tpu_custom_call.1}
  #allocation0 [shape = 'u32[]', space=smem, size = 0x4, offset = 0x4, fixed_abs, tag = 'smem constant byte address 0x4 - core index']
  #allocation1 [shape = 'u32[72,128]{1,0:T(1,128)}', space=vmem, size = 0x9000, scoped, tag = 'internal scratch']
  #allocation2 [shape = 'f32[1,1]{1,0:T(1,128)S(6)}', space=smem, size = 0x200, scoped, tag = 'scoped memory for tpu_custom_call.1']
  %s0 = inlined_call_operand.<no memory space> [shape: f32[1,1], index: 0, kind: input, shape index: {}]
  %s1 = inlined_call_operand.hbm [shape: f32[1,1000], index: 1, kind: input, shape index: {}]
  %s2 = inlined_call_operand.hbm [shape: f32[8,1000], index: 2, kind: input, shape index: {}]
  %s3 = inlined_call_operand.hbm [shape: f32[1,8], index: 3, kind: output, shape index: {}]
  %s4 = sld [smem:[#allocation0]]
  $region30: #{tpu_custom_call.1} parent=0
    _
  %s6 = ssub.s32 1, %s4
  %s7 = scalar_select 0, %s6, %s4
  %8 = sst [smem:[#allocation2]] %s0
  $region1: #{tpu_custom_call.1} parent=0
    #allocation3 [shape = 'u8[4096]{0}', space=vmem, size = 0x1000, scoped, tag = 'input window, operand 1, single buffered']
    #allocation4 [shape = 's32[1]{0}', space=sflag, size = 0x4, scoped, tag = 'scoped memory for tpu_custom_call.1']
    #allocation5 [shape = 's32[1]{0}', space=sflag, size = 0x4, scoped, tag = 'scoped memory for tpu_custom_call.1']
    #allocation6 [shape = 'u8[32768]{0}', space=vmem, size = 0x8000, scoped, tag = 'input window, operand 2, single buffered']
    #allocation7 [shape = 's32[1]{0}', space=sflag, size = 0x4, scoped, tag = 'scoped memory for tpu_custom_call.1']
    #allocation8 [shape = 'u8[512]{0}', space=vmem, size = 0x400, scoped, tag = 'output window, operand 0, single buffered']
    %9 = vsyncpa [#allocation4], 0
    %10 = vsyncpa [#allocation7], 0
    %11 = vsyncpa [#allocation5], 0
    // Predicated region
    $region2: #{tpu_custom_call.1} parent=1 // pred_check
      _
    $region3: #{tpu_custom_call.1} parent=1 // pred_check_branch
      %13 = sbr.rel (0) target = $region5
    $region4: #{tpu_custom_call.1} parent=1 // pred_region
      _
    $region5: #{tpu_custom_call.1} parent=1 // pred_fallthru
      _
    // Predicated region
    $region6: #{tpu_custom_call.1} parent=1 // pred_check
      _
    $region7: #{tpu_custom_call.1} parent=1 // pred_check_branch
      %15 = sbr.rel (0) target = $region9
    $region8: #{tpu_custom_call.1} parent=1 // pred_region
      %17 = vsyncadd [#allocation4], 0
      %s19 = sshll.u32 %s1, 4
      %s20 = int_to_ptr.hbm [resolvable:$true] %s19
      %s21 = sshll.u32 [#allocation3], 4
      %s22 = int_to_ptr.vmem [resolvable:$true] %s21
      %24 = dma.hbm_to_vmem [thread:$0]  %s20, 128, %s22, [#allocation4]
    $region9: #{tpu_custom_call.1} parent=1 // pred_fallthru
      _
    // Predicated region
    $region10: #{tpu_custom_call.1} parent=1 // pred_check
      _
    $region11: #{tpu_custom_call.1} parent=1 // pred_check_branch
      %26 = sbr.rel (0) target = $region13
    $region12: #{tpu_custom_call.1} parent=1 // pred_region
      %28 = vsyncadd [#allocation7], 0
      %s30 = sshll.u32 %s2, 4
      %s31 = int_to_ptr.hbm [resolvable:$true] %s30
      %s32 = sshll.u32 [#allocation6], 4
      %s33 = int_to_ptr.vmem [resolvable:$true] %s32
      %35 = dma.hbm_to_vmem [thread:$0]  %s31, 1024, %s33, [#allocation7]
    $region13: #{tpu_custom_call.1} parent=1 // pred_fallthru
      _
    // Predicated region
    $region14: #{tpu_custom_call.1} parent=1 // pred_check
      _
    $region15: #{tpu_custom_call.1} parent=1 // pred_check_branch
      %37 = sbr.rel (0) target = $region17
    $region16: #{tpu_custom_call.1} parent=1 // pred_region
      %39 = dma.done [#allocation4], 128
    $region17: #{tpu_custom_call.1} parent=1 // pred_fallthru
      _
    // Predicated region
    $region18: #{tpu_custom_call.1} parent=1 // pred_check
      _
    $region19: #{tpu_custom_call.1} parent=1 // pred_check_branch
      %41 = sbr.rel (0) target = $region21
    $region20: #{tpu_custom_call.1} parent=1 // pred_region
      %43 = dma.done [#allocation7], 1024
    $region21: #{tpu_custom_call.1} parent=1 // pred_fallthru
      _
    %v44 = vld [vmem:[#allocation3] sm:$0xff]
    %v45 = vld [vmem:[#allocation6] sm:$0xff]
    %v46 = vld [vmem:[#allocation6 + $0x8] sm:$0xff]
    %v47 = vld [vmem:[#allocation6 + $0x10] sm:$0xff]
    %v48 = vld [vmem:[#allocation6 + $0x18] sm:$0xff]
    %v49 = vld [vmem:[#allocation6 + $0x20] sm:$0xff]
    %v50 = vld [vmem:[#allocation6 + $0x28] sm:$0xff]
    %v51 = vld [vmem:[#allocation6 + $0x30] sm:$0xff]
    %v52 = vld [vmem:[#allocation6 + $0x38] sm:$0xff]
    %s53 = sld [smem:[#allocation2]]
    %v54 = vstv %s53
    %v56 = vperm.slane %v44, 0
    %v57 = vperm.slane %v44, 1
    %v58 = vperm.slane %v44, 2
    %v59 = vperm.slane %v44, 3
    %v60 = vperm.slane %v44, 4
    %v61 = vperm.slane %v44, 5
    %v62 = vperm.slane %v44, 6
    %v63 = vperm.slane %v44, 7
    %vm71 = vcmask 850944
    %v72 = vsel %vm71, %v63, 0
    %v75 = vsel %vm71, %v52, 0
    %77 = vmatpush.xpose.msra.mxu0 0.0
    %78 = vmatpush.xpose.msra.mxu0 0.0
    %79 = vmatpush.xpose.msra.mxu0 0.0
    %80 = vmatpush.xpose.msra.mxu0 0.0
    %81 = vmatpush.xpose.msra.mxu0 0.0
    %82 = vmatpush.xpose.msra.mxu0 0.0
    %83 = vmatpush.xpose.msra.mxu0 0.0
    %84 = vmatpush.xpose.msra.mxu0 0.0
    %85 = vmatpush.xpose.msra.mxu0 0.0
    %86 = vmatpush.xpose.msra.mxu0 0.0
    %87 = vmatpush.xpose.msra.mxu0 0.0
    %88 = vmatpush.xpose.msra.mxu0 0.0
    %89 = vmatpush.xpose.msra.mxu0 0.0
    %90 = vmatpush.xpose.msra.mxu0 0.0
    %91 = vmatpush.xpose.msra.mxu0 0.0
    %v92 = vand.u32 %v45, 4294901760
    %93 = vmatpush.xpose.msra.mxu0 %v92
    %v94 = vand.u32 %v56, 4294901760
    %v95 = vsub.f32 %v56, %v94
    %v96 = vand.u32 %v95, 4294901760
    %v97 = vsub.f32 %v95, %v96
    %v98 = vand.u32 %v97, 4294901760
    %99 = vmatmul.f32.gmra.mxu0 %v98
    %v100 = vpop.f32.mrf.mxu0
    %v101 = vadd.f32 %v54, %v100
    %102 = vdwg.mxu0
    %103 = vmatpush.xpose.msra.mxu0 0.0
    %104 = vmatpush.xpose.msra.mxu0 0.0
    %105 = vmatpush.xpose.msra.mxu0 0.0
    %106 = vmatpush.xpose.msra.mxu0 0.0
    %107 = vmatpush.xpose.msra.mxu0 0.0
    %108 = vmatpush.xpose.msra.mxu0 0.0
    %109 = vmatpush.xpose.msra.mxu0 0.0
    %110 = vmatpush.xpose.msra.mxu0 0.0
    %111 = vmatpush.xpose.msra.mxu0 0.0
    %112 = vmatpush.xpose.msra.mxu0 0.0
    %113 = vmatpush.xpose.msra.mxu0 0.0
    %114 = vmatpush.xpose.msra.mxu0 0.0
    %115 = vmatpush.xpose.msra.mxu0 0.0
    %116 = vmatpush.xpose.msra.mxu0 0.0
    %117 = vmatpush.xpose.msra.mxu0 0.0
    %v118 = vand.u32 %v45, 4294901760
    %v119 = vsub.f32 %v45, %v118
    %v120 = vand.u32 %v119, 4294901760
    %v121 = vsub.f32 %v119, %v120
    %v122 = vand.u32 %v121, 4294901760
    %123 = vmatpush.xpose.msra.mxu0 %v122
    %v124 = vand.u32 %v56, 4294901760
    %125 = vmatmul.f32.gmra.mxu0 %v124
    %v126 = vpop.f32.mrf.mxu0
    %v127 = vadd.f32 %v101, %v126
    %128 = vdwg.mxu0
    %129 = vmatpush.xpose.msra.mxu0 0.0
    %130 = vmatpush.xpose.msra.mxu0 0.0
    %131 = vmatpush.xpose.msra.mxu0 0.0
    %132 = vmatpush.xpose.msra.mxu0 0.0
    %133 = vmatpush.xpose.msra.mxu0 0.0
    %134 = vmatpush.xpose.msra.mxu0 0.0
    %135 = vmatpush.xpose.msra.mxu0 0.0
    %136 = vmatpush.xpose.msra.mxu0 0.0
    %137 = vmatpush.xpose.msra.mxu0 0.0
    %138 = vmatpush.xpose.msra.mxu0 0.0
    %139 = vmatpush.xpose.msra.mxu0 0.0
    %140 = vmatpush.xpose.msra.mxu0 0.0
    %141 = vmatpush.xpose.msra.mxu0 0.0
    %142 = vmatpush.xpose.msra.mxu0 0.0
    %143 = vmatpush.xpose.msra.mxu0 0.0
    %v144 = vand.u32 %v45, 4294901760
    %v145 = vsub.f32 %v45, %v144
    %146 = vmatpush.xpose.msra.mxu0 %v145
    %v147 = vand.u32 %v56, 4294901760
    %v148 = vsub.f32 %v56, %v147
    %149 = vmatmul.f32.gmra.mxu0 %v148
    %v150 = vpop.f32.mrf.mxu0
    %v151 = vadd.f32 %v127, %v150
    %152 = vdwg.mxu0
    %153 = vmatpush.xpose.msra.mxu0 0.0
    %154 = vmatpush.xpose.msra.mxu0 0.0
    %155 = vmatpush.xpose.msra.mxu0 0.0
    %156 = vmatpush.xpose.msra.mxu0 0.0
    %157 = vmatpush.xpose.msra.mxu0 0.0
    %158 = vmatpush.xpose.msra.mxu0 0.0
    %159 = vmatpush.xpose.msra.mxu0 0.0
    %160 = vmatpush.xpose.msra.mxu0 0.0
    %161 = vmatpush.xpose.msra.mxu0 0.0
    %162 = vmatpush.xpose.msra.mxu0 0.0
    %163 = vmatpush.xpose.msra.mxu0 0.0
    %164 = vmatpush.xpose.msra.mxu0 0.0
    %165 = vmatpush.xpose.msra.mxu0 0.0
    %166 = vmatpush.xpose.msra.mxu0 0.0
    %167 = vmatpush.xpose.msra.mxu0 0.0
    %v168 = vand.u32 %v45, 4294901760
    %169 = vmatpush.xpose.msra.mxu0 %v168
    %v170 = vand.u32 %v56, 4294901760
    %v171 = vsub.f32 %v56, %v170
    %v172 = vand.u32 %v171, 4294901760
    %173 = vmatmul.f32.gmra.mxu0 %v172
    %v174 = vpop.f32.mrf.mxu0
    %v175 = vadd.f32 %v151, %v174
    %176 = vdwg.mxu0
    %177 = vmatpush.xpose.msra.mxu0 0.0
    %178 = vmatpush.xpose.msra.mxu0 0.0
    %179 = vmatpush.xpose.msra.mxu0 0.0
    %180 = vmatpush.xpose.msra.mxu0 0.0
    %181 = vmatpush.xpose.msra.mxu0 0.0
    %182 = vmatpush.xpose.msra.mxu0 0.0
    %183 = vmatpush.xpose.msra.mxu0 0.0
    %184 = vmatpush.xpose.msra.mxu0 0.0
    %185 = vmatpush.xpose.msra.mxu0 0.0
    %186 = vmatpush.xpose.msra.mxu0 0.0
    %187 = vmatpush.xpose.msra.mxu0 0.0
    %188 = vmatpush.xpose.msra.mxu0 0.0
    %189 = vmatpush.xpose.msra.mxu0 0.0
    %190 = vmatpush.xpose.msra.mxu0 0.0
    %191 = vmatpush.xpose.msra.mxu0 0.0
    %v192 = vand.u32 %v45, 4294901760
    %v193 = vsub.f32 %v45, %v192
    %v194 = vand.u32 %v193, 4294901760
    %195 = vmatpush.xpose.msra.mxu0 %v194
    %v196 = vand.u32 %v56, 4294901760
    %197 = vmatmul.f32.gmra.mxu0 %v196
    %v198 = vpop.f32.mrf.mxu0
    %v199 = vadd.f32 %v175, %v198
    %200 = vdwg.mxu0
    %201 = vmatpush.xpose.msra.mxu0 0.0
    %202 = vmatpush.xpose.msra.mxu0 0.0
    %203 = vmatpush.xpose.msra.mxu0 0.0
    %204 = vmatpush.xpose.msra.mxu0 0.0
    %205 = vmatpush.xpose.msra.mxu0 0.0
    %206 = vmatpush.xpose.msra.mxu0 0.0
    %207 = vmatpush.xpose.msra.mxu0 0.0
    %208 = vmatpush.xpose.msra.mxu0 0.0
    %209 = vmatpush.xpose.msra.mxu0 0.0
    %210 = vmatpush.xpose.msra.mxu0 0.0
    %211 = vmatpush.xpose.msra.mxu0 0.0
    %212 = vmatpush.xpose.msra.mxu0 0.0
    %213 = vmatpush.xpose.msra.mxu0 0.0
    %214 = vmatpush.xpose.msra.mxu0 0.0
    %215 = vmatpush.xpose.msra.mxu0 0.0
    %v216 = vand.u32 %v45, 4294901760
    %217 = vmatpush.xpose.msra.mxu0 %v216
    %v218 = vand.u32 %v56, 4294901760
    %219 = vmatmul.f32.gmra.mxu0 %v218
    %v220 = vpop.f32.mrf.mxu0
    %v221 = vadd.f32 %v199, %v220
    %222 = vdwg.mxu0
    %223 = vmatpush.xpose.msra.mxu0 0.0
    %224 = vmatpush.xpose.msra.mxu0 0.0
    %225 = vmatpush.xpose.msra.mxu0 0.0
    %226 = vmatpush.xpose.msra.mxu0 0.0
    %227 = vmatpush.xpose.msra.mxu0 0.0
    %228 = vmatpush.xpose.msra.mxu0 0.0
    %229 = vmatpush.xpose.msra.mxu0 0.0
    %230 = vmatpush.xpose.msra.mxu0 0.0
    %231 = vmatpush.xpose.msra.mxu0 0.0
    %232 = vmatpush.xpose.msra.mxu0 0.0
    %233 = vmatpush.xpose.msra.mxu0 0.0
    %234 = vmatpush.xpose.msra.mxu0 0.0
    %235 = vmatpush.xpose.msra.mxu0 0.0
    %236 = vmatpush.xpose.msra.mxu0 0.0
    %237 = vmatpush.xpose.msra.mxu0 0.0
    %v238 = vand.u32 %v46, 4294901760
    %239 = vmatpush.xpose.msra.mxu0 %v238
    %v240 = vand.u32 %v57, 4294901760
    %v241 = vsub.f32 %v57, %v240
    %v242 = vand.u32 %v241, 4294901760
    %v243 = vsub.f32 %v241, %v242
    %v244 = vand.u32 %v243, 4294901760
    %245 = vmatmul.f32.gmra.mxu0 %v244
    %v246 = vpop.f32.mrf.mxu0
    %v247 = vadd.f32 %v221, %v246
    %248 = vdwg.mxu0
    %249 = vmatpush.xpose.msra.mxu0 0.0
    %250 = vmatpush.xpose.msra.mxu0 0.0
    %251 = vmatpush.xpose.msra.mxu0 0.0
    %252 = vmatpush.xpose.msra.mxu0 0.0
    %253 = vmatpush.xpose.msra.mxu0 0.0
    %254 = vmatpush.xpose.msra.mxu0 0.0
    %255 = vmatpush.xpose.msra.mxu0 0.0
    %256 = vmatpush.xpose.msra.mxu0 0.0
    %257 = vmatpush.xpose.msra.mxu0 0.0
    %258 = vmatpush.xpose.msra.mxu0 0.0
    %259 = vmatpush.xpose.msra.mxu0 0.0
    %260 = vmatpush.xpose.msra.mxu0 0.0
    %261 = vmatpush.xpose.msra.mxu0 0.0
    %262 = vmatpush.xpose.msra.mxu0 0.0
    %263 = vmatpush.xpose.msra.mxu0 0.0
    %v264 = vand.u32 %v46, 4294901760
    %v265 = vsub.f32 %v46, %v264
    %v266 = vand.u32 %v265, 4294901760
    %v267 = vsub.f32 %v265, %v266
    %v268 = vand.u32 %v267, 4294901760
    %269 = vmatpush.xpose.msra.mxu0 %v268
    %v270 = vand.u32 %v57, 4294901760
    %271 = vmatmul.f32.gmra.mxu0 %v270
    %v272 = vpop.f32.mrf.mxu0
    %v273 = vadd.f32 %v247, %v272
    %274 = vdwg.mxu0
    %275 = vmatpush.xpose.msra.mxu0 0.0
    %276 = vmatpush.xpose.msra.mxu0 0.0
    %277 = vmatpush.xpose.msra.mxu0 0.0
    %278 = vmatpush.xpose.msra.mxu0 0.0
    %279 = vmatpush.xpose.msra.mxu0 0.0
    %280 = vmatpush.xpose.msra.mxu0 0.0
    %281 = vmatpush.xpose.msra.mxu0 0.0
    %282 = vmatpush.xpose.msra.mxu0 0.0
    %283 = vmatpush.xpose.msra.mxu0 0.0
    %284 = vmatpush.xpose.msra.mxu0 0.0
    %285 = vmatpush.xpose.msra.mxu0 0.0
    %286 = vmatpush.xpose.msra.mxu0 0.0
    %287 = vmatpush.xpose.msra.mxu0 0.0
    %288 = vmatpush.xpose.msra.mxu0 0.0
    %289 = vmatpush.xpose.msra.mxu0 0.0
    %v290 = vand.u32 %v46, 4294901760
    %v291 = vsub.f32 %v46, %v290
    %292 = vmatpush.xpose.msra.mxu0 %v291
    %v293 = vand.u32 %v57, 4294901760
    %v294 = vsub.f32 %v57, %v293
    %295 = vmatmul.f32.gmra.mxu0 %v294
    %v296 = vpop.f32.mrf.mxu0
    %v297 = vadd.f32 %v273, %v296
    %298 = vdwg.mxu0
    %299 = vmatpush.xpose.msra.mxu0 0.0
    %300 = vmatpush.xpose.msra.mxu0 0.0
    %301 = vmatpush.xpose.msra.mxu0 0.0
    %302 = vmatpush.xpose.msra.mxu0 0.0
    %303 = vmatpush.xpose.msra.mxu0 0.0
    %304 = vmatpush.xpose.msra.mxu0 0.0
    %305 = vmatpush.xpose.msra.mxu0 0.0
    %306 = vmatpush.xpose.msra.mxu0 0.0
    %307 = vmatpush.xpose.msra.mxu0 0.0
    %308 = vmatpush.xpose.msra.mxu0 0.0
    %309 = vmatpush.xpose.msra.mxu0 0.0
    %310 = vmatpush.xpose.msra.mxu0 0.0
    %311 = vmatpush.xpose.msra.mxu0 0.0
    %312 = vmatpush.xpose.msra.mxu0 0.0
    %313 = vmatpush.xpose.msra.mxu0 0.0
    %v314 = vand.u32 %v46, 4294901760
    %315 = vmatpush.xpose.msra.mxu0 %v314
    %v316 = vand.u32 %v57, 4294901760
    %v317 = vsub.f32 %v57, %v316
    %v318 = vand.u32 %v317, 4294901760
    %319 = vmatmul.f32.gmra.mxu0 %v318
    %v320 = vpop.f32.mrf.mxu0
    %v321 = vadd.f32 %v297, %v320
    %322 = vdwg.mxu0
    %323 = vmatpush.xpose.msra.mxu0 0.0
    %324 = vmatpush.xpose.msra.mxu0 0.0
    %325 = vmatpush.xpose.msra.mxu0 0.0
    %326 = vmatpush.xpose.msra.mxu0 0.0
    %327 = vmatpush.xpose.msra.mxu0 0.0
    %328 = vmatpush.xpose.msra.mxu0 0.0
    %329 = vmatpush.xpose.msra.mxu0 0.0
    %330 = vmatpush.xpose.msra.mxu0 0.0
    %331 = vmatpush.xpose.msra.mxu0 0.0
    %332 = vmatpush.xpose.msra.mxu0 0.0
    %333 = vmatpush.xpose.msra.mxu0 0.0
    %334 = vmatpush.xpose.msra.mxu0 0.0
    %335 = vmatpush.xpose.msra.mxu0 0.0
    %336 = vmatpush.xpose.msra.mxu0 0.0
    %337 = vmatpush.xpose.msra.mxu0 0.0
    %v338 = vand.u32 %v46, 4294901760
    %v339 = vsub.f32 %v46, %v338
    %v340 = vand.u32 %v339, 4294901760
    %341 = vmatpush.xpose.msra.mxu0 %v340
    %v342 = vand.u32 %v57, 4294901760
    %343 = vmatmul.f32.gmra.mxu0 %v342
    %v344 = vpop.f32.mrf.mxu0
    %v345 = vadd.f32 %v321, %v344
    %346 = vdwg.mxu0
    %347 = vmatpush.xpose.msra.mxu0 0.0
    %348 = vmatpush.xpose.msra.mxu0 0.0
    %349 = vmatpush.xpose.msra.mxu0 0.0
    %350 = vmatpush.xpose.msra.mxu0 0.0
    %351 = vmatpush.xpose.msra.mxu0 0.0
    %352 = vmatpush.xpose.msra.mxu0 0.0
    %353 = vmatpush.xpose.msra.mxu0 0.0
    %354 = vmatpush.xpose.msra.mxu0 0.0
    %355 = vmatpush.xpose.msra.mxu0 0.0
    %356 = vmatpush.xpose.msra.mxu0 0.0
    %357 = vmatpush.xpose.msra.mxu0 0.0
    %358 = vmatpush.xpose.msra.mxu0 0.0
    %359 = vmatpush.xpose.msra.mxu0 0.0
    %360 = vmatpush.xpose.msra.mxu0 0.0
    %361 = vmatpush.xpose.msra.mxu0 0.0
    %v362 = vand.u32 %v46, 4294901760
    %363 = vmatpush.xpose.msra.mxu0 %v362
    %v364 = vand.u32 %v57, 4294901760
    %365 = vmatmul.f32.gmra.mxu0 %v364
    %v366 = vpop.f32.mrf.mxu0
    %v367 = vadd.f32 %v345, %v366
    %368 = vdwg.mxu0
    %369 = vmatpush.xpose.msra.mxu0 0.0
    %370 = vmatpush.xpose.msra.mxu0 0.0
    %371 = vmatpush.xpose.msra.mxu0 0.0
    %372 = vmatpush.xpose.msra.mxu0 0.0
    %373 = vmatpush.xpose.msra.mxu0 0.0
    %374 = vmatpush.xpose.msra.mxu0 0.0
    %375 = vmatpush.xpose.msra.mxu0 0.0
    %376 = vmatpush.xpose.msra.mxu0 0.0
    %377 = vmatpush.xpose.msra.mxu0 0.0
    %378 = vmatpush.xpose.msra.mxu0 0.0
    %379 = vmatpush.xpose.msra.mxu0 0.0
    %380 = vmatpush.xpose.msra.mxu0 0.0
    %381 = vmatpush.xpose.msra.mxu0 0.0
    %382 = vmatpush.xpose.msra.mxu0 0.0
    %383 = vmatpush.xpose.msra.mxu0 0.0
    %v384 = vand.u32 %v47, 4294901760
    %385 = vmatpush.xpose.msra.mxu0 %v384
    %v386 = vand.u32 %v58, 4294901760
    %v387 = vsub.f32 %v58, %v386
    %v388 = vand.u32 %v387, 4294901760
    %v389 = vsub.f32 %v387, %v388
    %v390 = vand.u32 %v389, 4294901760
    %391 = vmatmul.f32.gmra.mxu0 %v390
    %v392 = vpop.f32.mrf.mxu0
    %v393 = vadd.f32 %v367, %v392
    %394 = vdwg.mxu0
    %395 = vmatpush.xpose.msra.mxu0 0.0
    %396 = vmatpush.xpose.msra.mxu0 0.0
    %397 = vmatpush.xpose.msra.mxu0 0.0
    %398 = vmatpush.xpose.msra.mxu0 0.0
    %399 = vmatpush.xpose.msra.mxu0 0.0
    %400 = vmatpush.xpose.msra.mxu0 0.0
    %401 = vmatpush.xpose.msra.mxu0 0.0
    %402 = vmatpush.xpose.msra.mxu0 0.0
    %403 = vmatpush.xpose.msra.mxu0 0.0
    %404 = vmatpush.xpose.msra.mxu0 0.0
    %405 = vmatpush.xpose.msra.mxu0 0.0
    %406 = vmatpush.xpose.msra.mxu0 0.0
    %407 = vmatpush.xpose.msra.mxu0 0.0
    %408 = vmatpush.xpose.msra.mxu0 0.0
    %409 = vmatpush.xpose.msra.mxu0 0.0
    %v410 = vand.u32 %v47, 4294901760
    %v411 = vsub.f32 %v47, %v410
    %v412 = vand.u32 %v411, 4294901760
    %v413 = vsub.f32 %v411, %v412
    %v414 = vand.u32 %v413, 4294901760
    %415 = vmatpush.xpose.msra.mxu0 %v414
    %v416 = vand.u32 %v58, 4294901760
    %417 = vmatmul.f32.gmra.mxu0 %v416
    %v418 = vpop.f32.mrf.mxu0
    %v419 = vadd.f32 %v393, %v418
    %420 = vdwg.mxu0
    %421 = vmatpush.xpose.msra.mxu0 0.0
    %422 = vmatpush.xpose.msra.mxu0 0.0
    %423 = vmatpush.xpose.msra.mxu0 0.0
    %424 = vmatpush.xpose.msra.mxu0 0.0
    %425 = vmatpush.xpose.msra.mxu0 0.0
    %426 = vmatpush.xpose.msra.mxu0 0.0
    %427 = vmatpush.xpose.msra.mxu0 0.0
    %428 = vmatpush.xpose.msra.mxu0 0.0
    %429 = vmatpush.xpose.msra.mxu0 0.0
    %430 = vmatpush.xpose.msra.mxu0 0.0
    %431 = vmatpush.xpose.msra.mxu0 0.0
    %432 = vmatpush.xpose.msra.mxu0 0.0
    %433 = vmatpush.xpose.msra.mxu0 0.0
    %434 = vmatpush.xpose.msra.mxu0 0.0
    %435 = vmatpush.xpose.msra.mxu0 0.0
    %v436 = vand.u32 %v47, 4294901760
    %v437 = vsub.f32 %v47, %v436
    %438 = vmatpush.xpose.msra.mxu0 %v437
    %v439 = vand.u32 %v58, 4294901760
    %v440 = vsub.f32 %v58, %v439
    %441 = vmatmul.f32.gmra.mxu0 %v440
    %v442 = vpop.f32.mrf.mxu0
    %v443 = vadd.f32 %v419, %v442
    %444 = vdwg.mxu0
    %445 = vmatpush.xpose.msra.mxu0 0.0
    %446 = vmatpush.xpose.msra.mxu0 0.0
    %447 = vmatpush.xpose.msra.mxu0 0.0
    %448 = vmatpush.xpose.msra.mxu0 0.0
    %449 = vmatpush.xpose.msra.mxu0 0.0
    %450 = vmatpush.xpose.msra.mxu0 0.0
    %451 = vmatpush.xpose.msra.mxu0 0.0
    %452 = vmatpush.xpose.msra.mxu0 0.0
    %453 = vmatpush.xpose.msra.mxu0 0.0
    %454 = vmatpush.xpose.msra.mxu0 0.0
    %455 = vmatpush.xpose.msra.mxu0 0.0
    %456 = vmatpush.xpose.msra.mxu0 0.0
    %457 = vmatpush.xpose.msra.mxu0 0.0
    %458 = vmatpush.xpose.msra.mxu0 0.0
    %459 = vmatpush.xpose.msra.mxu0 0.0
    %v460 = vand.u32 %v47, 4294901760
    %461 = vmatpush.xpose.msra.mxu0 %v460
    %v462 = vand.u32 %v58, 4294901760
    %v463 = vsub.f32 %v58, %v462
    %v464 = vand.u32 %v463, 4294901760
    %465 = vmatmul.f32.gmra.mxu0 %v464
    %v466 = vpop.f32.mrf.mxu0
    %v467 = vadd.f32 %v443, %v466
    %468 = vdwg.mxu0
    %469 = vmatpush.xpose.msra.mxu0 0.0
    %470 = vmatpush.xpose.msra.mxu0 0.0
    %471 = vmatpush.xpose.msra.mxu0 0.0
    %472 = vmatpush.xpose.msra.mxu0 0.0
    %473 = vmatpush.xpose.msra.mxu0 0.0
    %474 = vmatpush.xpose.msra.mxu0 0.0
    %475 = vmatpush.xpose.msra.mxu0 0.0
    %476 = vmatpush.xpose.msra.mxu0 0.0
    %477 = vmatpush.xpose.msra.mxu0 0.0
    %478 = vmatpush.xpose.msra.mxu0 0.0
    %479 = vmatpush.xpose.msra.mxu0 0.0
    %480 = vmatpush.xpose.msra.mxu0 0.0
    %481 = vmatpush.xpose.msra.mxu0 0.0
    %482 = vmatpush.xpose.msra.mxu0 0.0
    %483 = vmatpush.xpose.msra.mxu0 0.0
    %v484 = vand.u32 %v47, 4294901760
    %v485 = vsub.f32 %v47, %v484
    %v486 = vand.u32 %v485, 4294901760
    %487 = vmatpush.xpose.msra.mxu0 %v486
    %v488 = vand.u32 %v58, 4294901760
    %489 = vmatmul.f32.gmra.mxu0 %v488
    %v490 = vpop.f32.mrf.mxu0
    %v491 = vadd.f32 %v467, %v490
    %492 = vdwg.mxu0
    %493 = vmatpush.xpose.msra.mxu0 0.0
    %494 = vmatpush.xpose.msra.mxu0 0.0
    %495 = vmatpush.xpose.msra.mxu0 0.0
    %496 = vmatpush.xpose.msra.mxu0 0.0
    %497 = vmatpush.xpose.msra.mxu0 0.0
    %498 = vmatpush.xpose.msra.mxu0 0.0
    %499 = vmatpush.xpose.msra.mxu0 0.0
    %500 = vmatpush.xpose.msra.mxu0 0.0
    %501 = vmatpush.xpose.msra.mxu0 0.0
    %502 = vmatpush.xpose.msra.mxu0 0.0
    %503 = vmatpush.xpose.msra.mxu0 0.0
    %504 = vmatpush.xpose.msra.mxu0 0.0
    %505 = vmatpush.xpose.msra.mxu0 0.0
    %506 = vmatpush.xpose.msra.mxu0 0.0
    %507 = vmatpush.xpose.msra.mxu0 0.0
    %v508 = vand.u32 %v47, 4294901760
    %509 = vmatpush.xpose.msra.mxu0 %v508
    %v510 = vand.u32 %v58, 4294901760
    %511 = vmatmul.f32.gmra.mxu0 %v510
    %v512 = vpop.f32.mrf.mxu0
    %v513 = vadd.f32 %v491, %v512
    %514 = vdwg.mxu0
    %515 = vmatpush.xpose.msra.mxu0 0.0
    %516 = vmatpush.xpose.msra.mxu0 0.0
    %517 = vmatpush.xpose.msra.mxu0 0.0
    %518 = vmatpush.xpose.msra.mxu0 0.0
    %519 = vmatpush.xpose.msra.mxu0 0.0
    %520 = vmatpush.xpose.msra.mxu0 0.0
    %521 = vmatpush.xpose.msra.mxu0 0.0
    %522 = vmatpush.xpose.msra.mxu0 0.0
    %523 = vmatpush.xpose.msra.mxu0 0.0
    %524 = vmatpush.xpose.msra.mxu0 0.0
    %525 = vmatpush.xpose.msra.mxu0 0.0
    %526 = vmatpush.xpose.msra.mxu0 0.0
    %527 = vmatpush.xpose.msra.mxu0 0.0
    %528 = vmatpush.xpose.msra.mxu0 0.0
    %529 = vmatpush.xpose.msra.mxu0 0.0
    %v530 = vand.u32 %v48, 4294901760
    %531 = vmatpush.xpose.msra.mxu0 %v530
    %v532 = vand.u32 %v59, 4294901760
    %v533 = vsub.f32 %v59, %v532
    %v534 = vand.u32 %v533, 4294901760
    %v535 = vsub.f32 %v533, %v534
    %v536 = vand.u32 %v535, 4294901760
    %537 = vmatmul.f32.gmra.mxu0 %v536
    %v538 = vpop.f32.mrf.mxu0
    %v539 = vadd.f32 %v513, %v538
    %540 = vdwg.mxu0
    %541 = vmatpush.xpose.msra.mxu0 0.0
    %542 = vmatpush.xpose.msra.mxu0 0.0
    %543 = vmatpush.xpose.msra.mxu0 0.0
    %544 = vmatpush.xpose.msra.mxu0 0.0
    %545 = vmatpush.xpose.msra.mxu0 0.0
    %546 = vmatpush.xpose.msra.mxu0 0.0
    %547 = vmatpush.xpose.msra.mxu0 0.0
    %548 = vmatpush.xpose.msra.mxu0 0.0
    %549 = vmatpush.xpose.msra.mxu0 0.0
    %550 = vmatpush.xpose.msra.mxu0 0.0
    %551 = vmatpush.xpose.msra.mxu0 0.0
    %552 = vmatpush.xpose.msra.mxu0 0.0
    %553 = vmatpush.xpose.msra.mxu0 0.0
    %554 = vmatpush.xpose.msra.mxu0 0.0
    %555 = vmatpush.xpose.msra.mxu0 0.0
    %v556 = vand.u32 %v48, 4294901760
    %v557 = vsub.f32 %v48, %v556
    %v558 = vand.u32 %v557, 4294901760
    %v559 = vsub.f32 %v557, %v558
    %v560 = vand.u32 %v559, 4294901760
    %561 = vmatpush.xpose.msra.mxu0 %v560
    %v562 = vand.u32 %v59, 4294901760
    %563 = vmatmul.f32.gmra.mxu0 %v562
    %v564 = vpop.f32.mrf.mxu0
    %v565 = vadd.f32 %v539, %v564
    %566 = vdwg.mxu0
    %567 = vmatpush.xpose.msra.mxu0 0.0
    %568 = vmatpush.xpose.msra.mxu0 0.0
    %569 = vmatpush.xpose.msra.mxu0 0.0
    %570 = vmatpush.xpose.msra.mxu0 0.0
    %571 = vmatpush.xpose.msra.mxu0 0.0
    %572 = vmatpush.xpose.msra.mxu0 0.0
    %573 = vmatpush.xpose.msra.mxu0 0.0
    %574 = vmatpush.xpose.msra.mxu0 0.0
    %575 = vmatpush.xpose.msra.mxu0 0.0
    %576 = vmatpush.xpose.msra.mxu0 0.0
    %577 = vmatpush.xpose.msra.mxu0 0.0
    %578 = vmatpush.xpose.msra.mxu0 0.0
    %579 = vmatpush.xpose.msra.mxu0 0.0
    %580 = vmatpush.xpose.msra.mxu0 0.0
    %581 = vmatpush.xpose.msra.mxu0 0.0
    %v582 = vand.u32 %v48, 4294901760
    %v583 = vsub.f32 %v48, %v582
    %584 = vmatpush.xpose.msra.mxu0 %v583
    %v585 = vand.u32 %v59, 4294901760
    %v586 = vsub.f32 %v59, %v585
    %587 = vmatmul.f32.gmra.mxu0 %v586
    %v588 = vpop.f32.mrf.mxu0
    %v589 = vadd.f32 %v565, %v588
    %590 = vdwg.mxu0
    %591 = vmatpush.xpose.msra.mxu0 0.0
    %592 = vmatpush.xpose.msra.mxu0 0.0
    %593 = vmatpush.xpose.msra.mxu0 0.0
    %594 = vmatpush.xpose.msra.mxu0 0.0
    %595 = vmatpush.xpose.msra.mxu0 0.0
    %596 = vmatpush.xpose.msra.mxu0 0.0
    %597 = vmatpush.xpose.msra.mxu0 0.0
    %598 = vmatpush.xpose.msra.mxu0 0.0
    %599 = vmatpush.xpose.msra.mxu0 0.0
    %600 = vmatpush.xpose.msra.mxu0 0.0
    %601 = vmatpush.xpose.msra.mxu0 0.0
    %602 = vmatpush.xpose.msra.mxu0 0.0
    %603 = vmatpush.xpose.msra.mxu0 0.0
    %604 = vmatpush.xpose.msra.mxu0 0.0
    %605 = vmatpush.xpose.msra.mxu0 0.0
    %v606 = vand.u32 %v48, 4294901760
    %607 = vmatpush.xpose.msra.mxu0 %v606
    %v608 = vand.u32 %v59, 4294901760
    %v609 = vsub.f32 %v59, %v608
    %v610 = vand.u32 %v609, 4294901760
    %611 = vmatmul.f32.gmra.mxu0 %v610
    %v612 = vpop.f32.mrf.mxu0
    %v613 = vadd.f32 %v589, %v612
    %614 = vdwg.mxu0
    %615 = vmatpush.xpose.msra.mxu0 0.0
    %616 = vmatpush.xpose.msra.mxu0 0.0
    %617 = vmatpush.xpose.msra.mxu0 0.0
    %618 = vmatpush.xpose.msra.mxu0 0.0
    %619 = vmatpush.xpose.msra.mxu0 0.0
    %620 = vmatpush.xpose.msra.mxu0 0.0
    %621 = vmatpush.xpose.msra.mxu0 0.0
    %622 = vmatpush.xpose.msra.mxu0 0.0
    %623 = vmatpush.xpose.msra.mxu0 0.0
    %624 = vmatpush.xpose.msra.mxu0 0.0
    %625 = vmatpush.xpose.msra.mxu0 0.0
    %626 = vmatpush.xpose.msra.mxu0 0.0
    %627 = vmatpush.xpose.msra.mxu0 0.0
    %628 = vmatpush.xpose.msra.mxu0 0.0
    %629 = vmatpush.xpose.msra.mxu0 0.0
    %v630 = vand.u32 %v48, 4294901760
    %v631 = vsub.f32 %v48, %v630
    %v632 = vand.u32 %v631, 4294901760
    %633 = vmatpush.xpose.msra.mxu0 %v632
    %v634 = vand.u32 %v59, 4294901760
    %635 = vmatmul.f32.gmra.mxu0 %v634
    %v636 = vpop.f32.mrf.mxu0
    %v637 = vadd.f32 %v613, %v636
    %638 = vdwg.mxu0
    %639 = vmatpush.xpose.msra.mxu0 0.0
    %640 = vmatpush.xpose.msra.mxu0 0.0
    %641 = vmatpush.xpose.msra.mxu0 0.0
    %642 = vmatpush.xpose.msra.mxu0 0.0
    %643 = vmatpush.xpose.msra.mxu0 0.0
    %644 = vmatpush.xpose.msra.mxu0 0.0
    %645 = vmatpush.xpose.msra.mxu0 0.0
    %646 = vmatpush.xpose.msra.mxu0 0.0
    %647 = vmatpush.xpose.msra.mxu0 0.0
    %648 = vmatpush.xpose.msra.mxu0 0.0
    %649 = vmatpush.xpose.msra.mxu0 0.0
    %650 = vmatpush.xpose.msra.mxu0 0.0
    %651 = vmatpush.xpose.msra.mxu0 0.0
    %652 = vmatpush.xpose.msra.mxu0 0.0
    %653 = vmatpush.xpose.msra.mxu0 0.0
    %v654 = vand.u32 %v48, 4294901760
    %655 = vmatpush.xpose.msra.mxu0 %v654
    %v656 = vand.u32 %v59, 4294901760
    %657 = vmatmul.f32.gmra.mxu0 %v656
    %v658 = vpop.f32.mrf.mxu0
    %v659 = vadd.f32 %v637, %v658
    %660 = vdwg.mxu0
    %661 = vmatpush.xpose.msra.mxu0 0.0
    %662 = vmatpush.xpose.msra.mxu0 0.0
    %663 = vmatpush.xpose.msra.mxu0 0.0
    %664 = vmatpush.xpose.msra.mxu0 0.0
    %665 = vmatpush.xpose.msra.mxu0 0.0
    %666 = vmatpush.xpose.msra.mxu0 0.0
    %667 = vmatpush.xpose.msra.mxu0 0.0
    %668 = vmatpush.xpose.msra.mxu0 0.0
    %669 = vmatpush.xpose.msra.mxu0 0.0
    %670 = vmatpush.xpose.msra.mxu0 0.0
    %671 = vmatpush.xpose.msra.mxu0 0.0
    %672 = vmatpush.xpose.msra.mxu0 0.0
    %673 = vmatpush.xpose.msra.mxu0 0.0
    %674 = vmatpush.xpose.msra.mxu0 0.0
    %675 = vmatpush.xpose.msra.mxu0 0.0
    %v676 = vand.u32 %v49, 4294901760
    %677 = vmatpush.xpose.msra.mxu0 %v676
    %v678 = vand.u32 %v60, 4294901760
    %v679 = vsub.f32 %v60, %v678
    %v680 = vand.u32 %v679, 4294901760
    %v681 = vsub.f32 %v679, %v680
    %v682 = vand.u32 %v681, 4294901760
    %683 = vmatmul.f32.gmra.mxu0 %v682
    %v684 = vpop.f32.mrf.mxu0
    %v685 = vadd.f32 %v659, %v684
    %686 = vdwg.mxu0
    %687 = vmatpush.xpose.msra.mxu0 0.0
    %688 = vmatpush.xpose.msra.mxu0 0.0
    %689 = vmatpush.xpose.msra.mxu0 0.0
    %690 = vmatpush.xpose.msra.mxu0 0.0
    %691 = vmatpush.xpose.msra.mxu0 0.0
    %692 = vmatpush.xpose.msra.mxu0 0.0
    %693 = vmatpush.xpose.msra.mxu0 0.0
    %694 = vmatpush.xpose.msra.mxu0 0.0
    %695 = vmatpush.xpose.msra.mxu0 0.0
    %696 = vmatpush.xpose.msra.mxu0 0.0
    %697 = vmatpush.xpose.msra.mxu0 0.0
    %698 = vmatpush.xpose.msra.mxu0 0.0
    %699 = vmatpush.xpose.msra.mxu0 0.0
    %700 = vmatpush.xpose.msra.mxu0 0.0
    %701 = vmatpush.xpose.msra.mxu0 0.0
    %v702 = vand.u32 %v49, 4294901760
    %v703 = vsub.f32 %v49, %v702
    %v704 = vand.u32 %v703, 4294901760
    %v705 = vsub.f32 %v703, %v704
    %v706 = vand.u32 %v705, 4294901760
    %707 = vmatpush.xpose.msra.mxu0 %v706
    %v708 = vand.u32 %v60, 4294901760
    %709 = vmatmul.f32.gmra.mxu0 %v708
    %v710 = vpop.f32.mrf.mxu0
    %v711 = vadd.f32 %v685, %v710
    %712 = vdwg.mxu0
    %713 = vmatpush.xpose.msra.mxu0 0.0
    %714 = vmatpush.xpose.msra.mxu0 0.0
    %715 = vmatpush.xpose.msra.mxu0 0.0
    %716 = vmatpush.xpose.msra.mxu0 0.0
    %717 = vmatpush.xpose.msra.mxu0 0.0
    %718 = vmatpush.xpose.msra.mxu0 0.0
    %719 = vmatpush.xpose.msra.mxu0 0.0
    %720 = vmatpush.xpose.msra.mxu0 0.0
    %721 = vmatpush.xpose.msra.mxu0 0.0
    %722 = vmatpush.xpose.msra.mxu0 0.0
    %723 = vmatpush.xpose.msra.mxu0 0.0
    %724 = vmatpush.xpose.msra.mxu0 0.0
    %725 = vmatpush.xpose.msra.mxu0 0.0
    %726 = vmatpush.xpose.msra.mxu0 0.0
    %727 = vmatpush.xpose.msra.mxu0 0.0
    %v728 = vand.u32 %v49, 4294901760
    %v729 = vsub.f32 %v49, %v728
    %730 = vmatpush.xpose.msra.mxu0 %v729
    %v731 = vand.u32 %v60, 4294901760
    %v732 = vsub.f32 %v60, %v731
    %733 = vmatmul.f32.gmra.mxu0 %v732
    %v734 = vpop.f32.mrf.mxu0
    %v735 = vadd.f32 %v711, %v734
    %736 = vdwg.mxu0
    %737 = vmatpush.xpose.msra.mxu0 0.0
    %738 = vmatpush.xpose.msra.mxu0 0.0
    %739 = vmatpush.xpose.msra.mxu0 0.0
    %740 = vmatpush.xpose.msra.mxu0 0.0
    %741 = vmatpush.xpose.msra.mxu0 0.0
    %742 = vmatpush.xpose.msra.mxu0 0.0
    %743 = vmatpush.xpose.msra.mxu0 0.0
    %744 = vmatpush.xpose.msra.mxu0 0.0
    %745 = vmatpush.xpose.msra.mxu0 0.0
    %746 = vmatpush.xpose.msra.mxu0 0.0
    %747 = vmatpush.xpose.msra.mxu0 0.0
    %748 = vmatpush.xpose.msra.mxu0 0.0
    %749 = vmatpush.xpose.msra.mxu0 0.0
    %750 = vmatpush.xpose.msra.mxu0 0.0
    %751 = vmatpush.xpose.msra.mxu0 0.0
    %v752 = vand.u32 %v49, 4294901760
    %753 = vmatpush.xpose.msra.mxu0 %v752
    %v754 = vand.u32 %v60, 4294901760
    %v755 = vsub.f32 %v60, %v754
    %v756 = vand.u32 %v755, 4294901760
    %757 = vmatmul.f32.gmra.mxu0 %v756
    %v758 = vpop.f32.mrf.mxu0
    %v759 = vadd.f32 %v735, %v758
    %760 = vdwg.mxu0
    %761 = vmatpush.xpose.msra.mxu0 0.0
    %762 = vmatpush.xpose.msra.mxu0 0.0
    %763 = vmatpush.xpose.msra.mxu0 0.0
    %764 = vmatpush.xpose.msra.mxu0 0.0
    %765 = vmatpush.xpose.msra.mxu0 0.0
    %766 = vmatpush.xpose.msra.mxu0 0.0
    %767 = vmatpush.xpose.msra.mxu0 0.0
    %768 = vmatpush.xpose.msra.mxu0 0.0
    %769 = vmatpush.xpose.msra.mxu0 0.0
    %770 = vmatpush.xpose.msra.mxu0 0.0
    %771 = vmatpush.xpose.msra.mxu0 0.0
    %772 = vmatpush.xpose.msra.mxu0 0.0
    %773 = vmatpush.xpose.msra.mxu0 0.0
    %774 = vmatpush.xpose.msra.mxu0 0.0
    %775 = vmatpush.xpose.msra.mxu0 0.0
    %v776 = vand.u32 %v49, 4294901760
    %v777 = vsub.f32 %v49, %v776
    %v778 = vand.u32 %v777, 4294901760
    %779 = vmatpush.xpose.msra.mxu0 %v778
    %v780 = vand.u32 %v60, 4294901760
    %781 = vmatmul.f32.gmra.mxu0 %v780
    %v782 = vpop.f32.mrf.mxu0
    %v783 = vadd.f32 %v759, %v782
    %784 = vdwg.mxu0
    %785 = vmatpush.xpose.msra.mxu0 0.0
    %786 = vmatpush.xpose.msra.mxu0 0.0
    %787 = vmatpush.xpose.msra.mxu0 0.0
    %788 = vmatpush.xpose.msra.mxu0 0.0
    %789 = vmatpush.xpose.msra.mxu0 0.0
    %790 = vmatpush.xpose.msra.mxu0 0.0
    %791 = vmatpush.xpose.msra.mxu0 0.0
    %792 = vmatpush.xpose.msra.mxu0 0.0
    %793 = vmatpush.xpose.msra.mxu0 0.0
    %794 = vmatpush.xpose.msra.mxu0 0.0
    %795 = vmatpush.xpose.msra.mxu0 0.0
    %796 = vmatpush.xpose.msra.mxu0 0.0
    %797 = vmatpush.xpose.msra.mxu0 0.0
    %798 = vmatpush.xpose.msra.mxu0 0.0
    %799 = vmatpush.xpose.msra.mxu0 0.0
    %v800 = vand.u32 %v49, 4294901760
    %801 = vmatpush.xpose.msra.mxu0 %v800
    %v802 = vand.u32 %v60, 4294901760
    %803 = vmatmul.f32.gmra.mxu0 %v802
    %v804 = vpop.f32.mrf.mxu0
    %v805 = vadd.f32 %v783, %v804
    %806 = vdwg.mxu0
    %807 = vmatpush.xpose.msra.mxu0 0.0
    %808 = vmatpush.xpose.msra.mxu0 0.0
    %809 = vmatpush.xpose.msra.mxu0 0.0
    %810 = vmatpush.xpose.msra.mxu0 0.0
    %811 = vmatpush.xpose.msra.mxu0 0.0
    %812 = vmatpush.xpose.msra.mxu0 0.0
    %813 = vmatpush.xpose.msra.mxu0 0.0
    %814 = vmatpush.xpose.msra.mxu0 0.0
    %815 = vmatpush.xpose.msra.mxu0 0.0
    %816 = vmatpush.xpose.msra.mxu0 0.0
    %817 = vmatpush.xpose.msra.mxu0 0.0
    %818 = vmatpush.xpose.msra.mxu0 0.0
    %819 = vmatpush.xpose.msra.mxu0 0.0
    %820 = vmatpush.xpose.msra.mxu0 0.0
    %821 = vmatpush.xpose.msra.mxu0 0.0
    %v822 = vand.u32 %v50, 4294901760
    %823 = vmatpush.xpose.msra.mxu0 %v822
    %v824 = vand.u32 %v61, 4294901760
    %v825 = vsub.f32 %v61, %v824
    %v826 = vand.u32 %v825, 4294901760
    %v827 = vsub.f32 %v825, %v826
    %v828 = vand.u32 %v827, 4294901760
    %829 = vmatmul.f32.gmra.mxu0 %v828
    %v830 = vpop.f32.mrf.mxu0
    %v831 = vadd.f32 %v805, %v830
    %832 = vdwg.mxu0
    %833 = vmatpush.xpose.msra.mxu0 0.0
    %834 = vmatpush.xpose.msra.mxu0 0.0
    %835 = vmatpush.xpose.msra.mxu0 0.0
    %836 = vmatpush.xpose.msra.mxu0 0.0
    %837 = vmatpush.xpose.msra.mxu0 0.0
    %838 = vmatpush.xpose.msra.mxu0 0.0
    %839 = vmatpush.xpose.msra.mxu0 0.0
    %840 = vmatpush.xpose.msra.mxu0 0.0
    %841 = vmatpush.xpose.msra.mxu0 0.0
    %842 = vmatpush.xpose.msra.mxu0 0.0
    %843 = vmatpush.xpose.msra.mxu0 0.0
    %844 = vmatpush.xpose.msra.mxu0 0.0
    %845 = vmatpush.xpose.msra.mxu0 0.0
    %846 = vmatpush.xpose.msra.mxu0 0.0
    %847 = vmatpush.xpose.msra.mxu0 0.0
    %v848 = vand.u32 %v50, 4294901760
    %v849 = vsub.f32 %v50, %v848
    %v850 = vand.u32 %v849, 4294901760
    %v851 = vsub.f32 %v849, %v850
    %v852 = vand.u32 %v851, 4294901760
    %853 = vmatpush.xpose.msra.mxu0 %v852
    %v854 = vand.u32 %v61, 4294901760
    %855 = vmatmul.f32.gmra.mxu0 %v854
    %v856 = vpop.f32.mrf.mxu0
    %v857 = vadd.f32 %v831, %v856
    %858 = vdwg.mxu0
    %859 = vmatpush.xpose.msra.mxu0 0.0
    %860 = vmatpush.xpose.msra.mxu0 0.0
    %861 = vmatpush.xpose.msra.mxu0 0.0
    %862 = vmatpush.xpose.msra.mxu0 0.0
    %863 = vmatpush.xpose.msra.mxu0 0.0
    %864 = vmatpush.xpose.msra.mxu0 0.0
    %865 = vmatpush.xpose.msra.mxu0 0.0
    %866 = vmatpush.xpose.msra.mxu0 0.0
    %867 = vmatpush.xpose.msra.mxu0 0.0
    %868 = vmatpush.xpose.msra.mxu0 0.0
    %869 = vmatpush.xpose.msra.mxu0 0.0
    %870 = vmatpush.xpose.msra.mxu0 0.0
    %871 = vmatpush.xpose.msra.mxu0 0.0
    %872 = vmatpush.xpose.msra.mxu0 0.0
    %873 = vmatpush.xpose.msra.mxu0 0.0
    %v874 = vand.u32 %v50, 4294901760
    %v875 = vsub.f32 %v50, %v874
    %876 = vmatpush.xpose.msra.mxu0 %v875
    %v877 = vand.u32 %v61, 4294901760
    %v878 = vsub.f32 %v61, %v877
    %879 = vmatmul.f32.gmra.mxu0 %v878
    %v880 = vpop.f32.mrf.mxu0
    %v881 = vadd.f32 %v857, %v880
    %882 = vdwg.mxu0
    %883 = vmatpush.xpose.msra.mxu0 0.0
    %884 = vmatpush.xpose.msra.mxu0 0.0
    %885 = vmatpush.xpose.msra.mxu0 0.0
    %886 = vmatpush.xpose.msra.mxu0 0.0
    %887 = vmatpush.xpose.msra.mxu0 0.0
    %888 = vmatpush.xpose.msra.mxu0 0.0
    %889 = vmatpush.xpose.msra.mxu0 0.0
    %890 = vmatpush.xpose.msra.mxu0 0.0
    %891 = vmatpush.xpose.msra.mxu0 0.0
    %892 = vmatpush.xpose.msra.mxu0 0.0
    %893 = vmatpush.xpose.msra.mxu0 0.0
    %894 = vmatpush.xpose.msra.mxu0 0.0
    %895 = vmatpush.xpose.msra.mxu0 0.0
    %896 = vmatpush.xpose.msra.mxu0 0.0
    %897 = vmatpush.xpose.msra.mxu0 0.0
    %v898 = vand.u32 %v50, 4294901760
    %899 = vmatpush.xpose.msra.mxu0 %v898
    %v900 = vand.u32 %v61, 4294901760
    %v901 = vsub.f32 %v61, %v900
    %v902 = vand.u32 %v901, 4294901760
    %903 = vmatmul.f32.gmra.mxu0 %v902
    %v904 = vpop.f32.mrf.mxu0
    %v905 = vadd.f32 %v881, %v904
    %906 = vdwg.mxu0
    %907 = vmatpush.xpose.msra.mxu0 0.0
    %908 = vmatpush.xpose.msra.mxu0 0.0
    %909 = vmatpush.xpose.msra.mxu0 0.0
    %910 = vmatpush.xpose.msra.mxu0 0.0
    %911 = vmatpush.xpose.msra.mxu0 0.0
    %912 = vmatpush.xpose.msra.mxu0 0.0
    %913 = vmatpush.xpose.msra.mxu0 0.0
    %914 = vmatpush.xpose.msra.mxu0 0.0
    %915 = vmatpush.xpose.msra.mxu0 0.0
    %916 = vmatpush.xpose.msra.mxu0 0.0
    %917 = vmatpush.xpose.msra.mxu0 0.0
    %918 = vmatpush.xpose.msra.mxu0 0.0
    %919 = vmatpush.xpose.msra.mxu0 0.0
    %920 = vmatpush.xpose.msra.mxu0 0.0
    %921 = vmatpush.xpose.msra.mxu0 0.0
    %v922 = vand.u32 %v50, 4294901760
    %v923 = vsub.f32 %v50, %v922
    %v924 = vand.u32 %v923, 4294901760
    %925 = vmatpush.xpose.msra.mxu0 %v924
    %v926 = vand.u32 %v61, 4294901760
    %927 = vmatmul.f32.gmra.mxu0 %v926
    %v928 = vpop.f32.mrf.mxu0
    %v929 = vadd.f32 %v905, %v928
    %930 = vdwg.mxu0
    %931 = vmatpush.xpose.msra.mxu0 0.0
    %932 = vmatpush.xpose.msra.mxu0 0.0
    %933 = vmatpush.xpose.msra.mxu0 0.0
    %934 = vmatpush.xpose.msra.mxu0 0.0
    %935 = vmatpush.xpose.msra.mxu0 0.0
    %936 = vmatpush.xpose.msra.mxu0 0.0
    %937 = vmatpush.xpose.msra.mxu0 0.0
    %938 = vmatpush.xpose.msra.mxu0 0.0
    %939 = vmatpush.xpose.msra.mxu0 0.0
    %940 = vmatpush.xpose.msra.mxu0 0.0
    %941 = vmatpush.xpose.msra.mxu0 0.0
    %942 = vmatpush.xpose.msra.mxu0 0.0
    %943 = vmatpush.xpose.msra.mxu0 0.0
    %944 = vmatpush.xpose.msra.mxu0 0.0
    %945 = vmatpush.xpose.msra.mxu0 0.0
    %v946 = vand.u32 %v50, 4294901760
    %947 = vmatpush.xpose.msra.mxu0 %v946
    %v948 = vand.u32 %v61, 4294901760
    %949 = vmatmul.f32.gmra.mxu0 %v948
    %v950 = vpop.f32.mrf.mxu0
    %v951 = vadd.f32 %v929, %v950
    %952 = vdwg.mxu0
    %953 = vmatpush.xpose.msra.mxu0 0.0
    %954 = vmatpush.xpose.msra.mxu0 0.0
    %955 = vmatpush.xpose.msra.mxu0 0.0
    %956 = vmatpush.xpose.msra.mxu0 0.0
    %957 = vmatpush.xpose.msra.mxu0 0.0
    %958 = vmatpush.xpose.msra.mxu0 0.0
    %959 = vmatpush.xpose.msra.mxu0 0.0
    %960 = vmatpush.xpose.msra.mxu0 0.0
    %961 = vmatpush.xpose.msra.mxu0 0.0
    %962 = vmatpush.xpose.msra.mxu0 0.0
    %963 = vmatpush.xpose.msra.mxu0 0.0
    %964 = vmatpush.xpose.msra.mxu0 0.0
    %965 = vmatpush.xpose.msra.mxu0 0.0
    %966 = vmatpush.xpose.msra.mxu0 0.0
    %967 = vmatpush.xpose.msra.mxu0 0.0
    %v968 = vand.u32 %v51, 4294901760
    %969 = vmatpush.xpose.msra.mxu0 %v968
    %v970 = vand.u32 %v62, 4294901760
    %v971 = vsub.f32 %v62, %v970
    %v972 = vand.u32 %v971, 4294901760
    %v973 = vsub.f32 %v971, %v972
    %v974 = vand.u32 %v973, 4294901760
    %975 = vmatmul.f32.gmra.mxu0 %v974
    %v976 = vpop.f32.mrf.mxu0
    %v977 = vadd.f32 %v951, %v976
    %978 = vdwg.mxu0
    %979 = vmatpush.xpose.msra.mxu0 0.0
    %980 = vmatpush.xpose.msra.mxu0 0.0
    %981 = vmatpush.xpose.msra.mxu0 0.0
    %982 = vmatpush.xpose.msra.mxu0 0.0
    %983 = vmatpush.xpose.msra.mxu0 0.0
    %984 = vmatpush.xpose.msra.mxu0 0.0
    %985 = vmatpush.xpose.msra.mxu0 0.0
    %986 = vmatpush.xpose.msra.mxu0 0.0
    %987 = vmatpush.xpose.msra.mxu0 0.0
    %988 = vmatpush.xpose.msra.mxu0 0.0
    %989 = vmatpush.xpose.msra.mxu0 0.0
    %990 = vmatpush.xpose.msra.mxu0 0.0
    %991 = vmatpush.xpose.msra.mxu0 0.0
    %992 = vmatpush.xpose.msra.mxu0 0.0
    %993 = vmatpush.xpose.msra.mxu0 0.0
    %v994 = vand.u32 %v51, 4294901760
    %v995 = vsub.f32 %v51, %v994
    %v996 = vand.u32 %v995, 4294901760
    %v997 = vsub.f32 %v995, %v996
    %v998 = vand.u32 %v997, 4294901760
    %999 = vmatpush.xpose.msra.mxu0 %v998
    %v1000 = vand.u32 %v62, 4294901760
    %1001 = vmatmul.f32.gmra.mxu0 %v1000
    %v1002 = vpop.f32.mrf.mxu0
    %v1003 = vadd.f32 %v977, %v1002
    %1004 = vdwg.mxu0
    %1005 = vmatpush.xpose.msra.mxu0 0.0
    %1006 = vmatpush.xpose.msra.mxu0 0.0
    %1007 = vmatpush.xpose.msra.mxu0 0.0
    %1008 = vmatpush.xpose.msra.mxu0 0.0
    %1009 = vmatpush.xpose.msra.mxu0 0.0
    %1010 = vmatpush.xpose.msra.mxu0 0.0
    %1011 = vmatpush.xpose.msra.mxu0 0.0
    %1012 = vmatpush.xpose.msra.mxu0 0.0
    %1013 = vmatpush.xpose.msra.mxu0 0.0
    %1014 = vmatpush.xpose.msra.mxu0 0.0
    %1015 = vmatpush.xpose.msra.mxu0 0.0
    %1016 = vmatpush.xpose.msra.mxu0 0.0
    %1017 = vmatpush.xpose.msra.mxu0 0.0
    %1018 = vmatpush.xpose.msra.mxu0 0.0
    %1019 = vmatpush.xpose.msra.mxu0 0.0
    %v1020 = vand.u32 %v51, 4294901760
    %v1021 = vsub.f32 %v51, %v1020
    %1022 = vmatpush.xpose.msra.mxu0 %v1021
    %v1023 = vand.u32 %v62, 4294901760
    %v1024 = vsub.f32 %v62, %v1023
    %1025 = vmatmul.f32.gmra.mxu0 %v1024
    %v1026 = vpop.f32.mrf.mxu0
    %v1027 = vadd.f32 %v1003, %v1026
    %1028 = vdwg.mxu0
    %1029 = vmatpush.xpose.msra.mxu0 0.0
    %1030 = vmatpush.xpose.msra.mxu0 0.0
    %1031 = vmatpush.xpose.msra.mxu0 0.0
    %1032 = vmatpush.xpose.msra.mxu0 0.0
    %1033 = vmatpush.xpose.msra.mxu0 0.0
    %1034 = vmatpush.xpose.msra.mxu0 0.0
    %1035 = vmatpush.xpose.msra.mxu0 0.0
    %1036 = vmatpush.xpose.msra.mxu0 0.0
    %1037 = vmatpush.xpose.msra.mxu0 0.0
    %1038 = vmatpush.xpose.msra.mxu0 0.0
    %1039 = vmatpush.xpose.msra.mxu0 0.0
    %1040 = vmatpush.xpose.msra.mxu0 0.0
    %1041 = vmatpush.xpose.msra.mxu0 0.0
    %1042 = vmatpush.xpose.msra.mxu0 0.0
    %1043 = vmatpush.xpose.msra.mxu0 0.0
    %v1044 = vand.u32 %v51, 4294901760
    %1045 = vmatpush.xpose.msra.mxu0 %v1044
    %v1046 = vand.u32 %v62, 4294901760
    %v1047 = vsub.f32 %v62, %v1046
    %v1048 = vand.u32 %v1047, 4294901760
    %1049 = vmatmul.f32.gmra.mxu0 %v1048
    %v1050 = vpop.f32.mrf.mxu0
    %v1051 = vadd.f32 %v1027, %v1050
    %1052 = vdwg.mxu0
    %1053 = vmatpush.xpose.msra.mxu0 0.0
    %1054 = vmatpush.xpose.msra.mxu0 0.0
    %1055 = vmatpush.xpose.msra.mxu0 0.0
    %1056 = vmatpush.xpose.msra.mxu0 0.0
    %1057 = vmatpush.xpose.msra.mxu0 0.0
    %1058 = vmatpush.xpose.msra.mxu0 0.0
    %1059 = vmatpush.xpose.msra.mxu0 0.0
    %1060 = vmatpush.xpose.msra.mxu0 0.0
    %1061 = vmatpush.xpose.msra.mxu0 0.0
    %1062 = vmatpush.xpose.msra.mxu0 0.0
    %1063 = vmatpush.xpose.msra.mxu0 0.0
    %1064 = vmatpush.xpose.msra.mxu0 0.0
    %1065 = vmatpush.xpose.msra.mxu0 0.0
    %1066 = vmatpush.xpose.msra.mxu0 0.0
    %1067 = vmatpush.xpose.msra.mxu0 0.0
    %v1068 = vand.u32 %v51, 4294901760
    %v1069 = vsub.f32 %v51, %v1068
    %v1070 = vand.u32 %v1069, 4294901760
    %1071 = vmatpush.xpose.msra.mxu0 %v1070
    %v1072 = vand.u32 %v62, 4294901760
    %1073 = vmatmul.f32.gmra.mxu0 %v1072
    %v1074 = vpop.f32.mrf.mxu0
    %v1075 = vadd.f32 %v1051, %v1074
    %1076 = vdwg.mxu0
    %1077 = vmatpush.xpose.msra.mxu0 0.0
    %1078 = vmatpush.xpose.msra.mxu0 0.0
    %1079 = vmatpush.xpose.msra.mxu0 0.0
    %1080 = vmatpush.xpose.msra.mxu0 0.0
    %1081 = vmatpush.xpose.msra.mxu0 0.0
    %1082 = vmatpush.xpose.msra.mxu0 0.0
    %1083 = vmatpush.xpose.msra.mxu0 0.0
    %1084 = vmatpush.xpose.msra.mxu0 0.0
    %1085 = vmatpush.xpose.msra.mxu0 0.0
    %1086 = vmatpush.xpose.msra.mxu0 0.0
    %1087 = vmatpush.xpose.msra.mxu0 0.0
    %1088 = vmatpush.xpose.msra.mxu0 0.0
    %1089 = vmatpush.xpose.msra.mxu0 0.0
    %1090 = vmatpush.xpose.msra.mxu0 0.0
    %1091 = vmatpush.xpose.msra.mxu0 0.0
    %v1092 = vand.u32 %v51, 4294901760
    %1093 = vmatpush.xpose.msra.mxu0 %v1092
    %v1094 = vand.u32 %v62, 4294901760
    %1095 = vmatmul.f32.gmra.mxu0 %v1094
    %v1096 = vpop.f32.mrf.mxu0
    %v1097 = vadd.f32 %v1075, %v1096
    %1098 = vdwg.mxu0
    %1099 = vmatpush.xpose.msra.mxu0 0.0
    %1100 = vmatpush.xpose.msra.mxu0 0.0
    %1101 = vmatpush.xpose.msra.mxu0 0.0
    %1102 = vmatpush.xpose.msra.mxu0 0.0
    %1103 = vmatpush.xpose.msra.mxu0 0.0
    %1104 = vmatpush.xpose.msra.mxu0 0.0
    %1105 = vmatpush.xpose.msra.mxu0 0.0
    %1106 = vmatpush.xpose.msra.mxu0 0.0
    %1107 = vmatpush.xpose.msra.mxu0 0.0
    %1108 = vmatpush.xpose.msra.mxu0 0.0
    %1109 = vmatpush.xpose.msra.mxu0 0.0
    %1110 = vmatpush.xpose.msra.mxu0 0.0
    %1111 = vmatpush.xpose.msra.mxu0 0.0
    %1112 = vmatpush.xpose.msra.mxu0 0.0
    %1113 = vmatpush.xpose.msra.mxu0 0.0
    %v1114 = vand.u32 %v75, 4294901760
    %1115 = vmatpush.xpose.msra.mxu0 %v1114
    %v1116 = vand.u32 %v72, 4294901760
    %v1117 = vsub.f32 %v72, %v1116
    %v1118 = vand.u32 %v1117, 4294901760
    %v1119 = vsub.f32 %v1117, %v1118
    %v1120 = vand.u32 %v1119, 4294901760
    %1121 = vmatmul.f32.gmra.mxu0 %v1120
    %v1122 = vpop.f32.mrf.mxu0
    %v1123 = vadd.f32 %v1097, %v1122
    %1124 = vdwg.mxu0
    %1125 = vmatpush.xpose.msra.mxu0 0.0
    %1126 = vmatpush.xpose.msra.mxu0 0.0
    %1127 = vmatpush.xpose.msra.mxu0 0.0
    %1128 = vmatpush.xpose.msra.mxu0 0.0
    %1129 = vmatpush.xpose.msra.mxu0 0.0
    %1130 = vmatpush.xpose.msra.mxu0 0.0
    %1131 = vmatpush.xpose.msra.mxu0 0.0
    %1132 = vmatpush.xpose.msra.mxu0 0.0
    %1133 = vmatpush.xpose.msra.mxu0 0.0
    %1134 = vmatpush.xpose.msra.mxu0 0.0
    %1135 = vmatpush.xpose.msra.mxu0 0.0
    %1136 = vmatpush.xpose.msra.mxu0 0.0
    %1137 = vmatpush.xpose.msra.mxu0 0.0
    %1138 = vmatpush.xpose.msra.mxu0 0.0
    %1139 = vmatpush.xpose.msra.mxu0 0.0
    %v1140 = vand.u32 %v75, 4294901760
    %v1141 = vsub.f32 %v75, %v1140
    %v1142 = vand.u32 %v1141, 4294901760
    %v1143 = vsub.f32 %v1141, %v1142
    %v1144 = vand.u32 %v1143, 4294901760
    %1145 = vmatpush.xpose.msra.mxu0 %v1144
    %v1146 = vand.u32 %v72, 4294901760
    %1147 = vmatmul.f32.gmra.mxu0 %v1146
    %v1148 = vpop.f32.mrf.mxu0
    %v1149 = vadd.f32 %v1123, %v1148
    %1150 = vdwg.mxu0
    %1151 = vmatpush.xpose.msra.mxu0 0.0
    %1152 = vmatpush.xpose.msra.mxu0 0.0
    %1153 = vmatpush.xpose.msra.mxu0 0.0
    %1154 = vmatpush.xpose.msra.mxu0 0.0
    %1155 = vmatpush.xpose.msra.mxu0 0.0
    %1156 = vmatpush.xpose.msra.mxu0 0.0
    %1157 = vmatpush.xpose.msra.mxu0 0.0
    %1158 = vmatpush.xpose.msra.mxu0 0.0
    %1159 = vmatpush.xpose.msra.mxu0 0.0
    %1160 = vmatpush.xpose.msra.mxu0 0.0
    %1161 = vmatpush.xpose.msra.mxu0 0.0
    %1162 = vmatpush.xpose.msra.mxu0 0.0
    %1163 = vmatpush.xpose.msra.mxu0 0.0
    %1164 = vmatpush.xpose.msra.mxu0 0.0
    %1165 = vmatpush.xpose.msra.mxu0 0.0
    %v1166 = vand.u32 %v75, 4294901760
    %v1167 = vsub.f32 %v75, %v1166
    %1168 = vmatpush.xpose.msra.mxu0 %v1167
    %v1169 = vand.u32 %v72, 4294901760
    %v1170 = vsub.f32 %v72, %v1169
    %1171 = vmatmul.f32.gmra.mxu0 %v1170
    %v1172 = vpop.f32.mrf.mxu0
    %v1173 = vadd.f32 %v1149, %v1172
    %1174 = vdwg.mxu0
    %1175 = vmatpush.xpose.msra.mxu0 0.0
    %1176 = vmatpush.xpose.msra.mxu0 0.0
    %1177 = vmatpush.xpose.msra.mxu0 0.0
    %1178 = vmatpush.xpose.msra.mxu0 0.0
    %1179 = vmatpush.xpose.msra.mxu0 0.0
    %1180 = vmatpush.xpose.msra.mxu0 0.0
    %1181 = vmatpush.xpose.msra.mxu0 0.0
    %1182 = vmatpush.xpose.msra.mxu0 0.0
    %1183 = vmatpush.xpose.msra.mxu0 0.0
    %1184 = vmatpush.xpose.msra.mxu0 0.0
    %1185 = vmatpush.xpose.msra.mxu0 0.0
    %1186 = vmatpush.xpose.msra.mxu0 0.0
    %1187 = vmatpush.xpose.msra.mxu0 0.0
    %1188 = vmatpush.xpose.msra.mxu0 0.0
    %1189 = vmatpush.xpose.msra.mxu0 0.0
    %v1190 = vand.u32 %v75, 4294901760
    %1191 = vmatpush.xpose.msra.mxu0 %v1190
    %v1192 = vand.u32 %v72, 4294901760
    %v1193 = vsub.f32 %v72, %v1192
    %v1194 = vand.u32 %v1193, 4294901760
    %1195 = vmatmul.f32.gmra.mxu0 %v1194
    %v1196 = vpop.f32.mrf.mxu0
    %v1197 = vadd.f32 %v1173, %v1196
    %1198 = vdwg.mxu0
    %1199 = vmatpush.xpose.msra.mxu0 0.0
    %1200 = vmatpush.xpose.msra.mxu0 0.0
    %1201 = vmatpush.xpose.msra.mxu0 0.0
    %1202 = vmatpush.xpose.msra.mxu0 0.0
    %1203 = vmatpush.xpose.msra.mxu0 0.0
    %1204 = vmatpush.xpose.msra.mxu0 0.0
    %1205 = vmatpush.xpose.msra.mxu0 0.0
    %1206 = vmatpush.xpose.msra.mxu0 0.0
    %1207 = vmatpush.xpose.msra.mxu0 0.0
    %1208 = vmatpush.xpose.msra.mxu0 0.0
    %1209 = vmatpush.xpose.msra.mxu0 0.0
    %1210 = vmatpush.xpose.msra.mxu0 0.0
    %1211 = vmatpush.xpose.msra.mxu0 0.0
    %1212 = vmatpush.xpose.msra.mxu0 0.0
    %1213 = vmatpush.xpose.msra.mxu0 0.0
    %v1214 = vand.u32 %v75, 4294901760
    %v1215 = vsub.f32 %v75, %v1214
    %v1216 = vand.u32 %v1215, 4294901760
    %1217 = vmatpush.xpose.msra.mxu0 %v1216
    %v1218 = vand.u32 %v72, 4294901760
    %1219 = vmatmul.f32.gmra.mxu0 %v1218
    %v1220 = vpop.f32.mrf.mxu0
    %v1221 = vadd.f32 %v1197, %v1220
    %1222 = vdwg.mxu0
    %1223 = vmatpush.xpose.msra.mxu0 0.0
    %1224 = vmatpush.xpose.msra.mxu0 0.0
    %1225 = vmatpush.xpose.msra.mxu0 0.0
    %1226 = vmatpush.xpose.msra.mxu0 0.0
    %1227 = vmatpush.xpose.msra.mxu0 0.0
    %1228 = vmatpush.xpose.msra.mxu0 0.0
    %1229 = vmatpush.xpose.msra.mxu0 0.0
    %1230 = vmatpush.xpose.msra.mxu0 0.0
    %1231 = vmatpush.xpose.msra.mxu0 0.0
    %1232 = vmatpush.xpose.msra.mxu0 0.0
    %1233 = vmatpush.xpose.msra.mxu0 0.0
    %1234 = vmatpush.xpose.msra.mxu0 0.0
    %1235 = vmatpush.xpose.msra.mxu0 0.0
    %1236 = vmatpush.xpose.msra.mxu0 0.0
    %1237 = vmatpush.xpose.msra.mxu0 0.0
    %v1238 = vand.u32 %v75, 4294901760
    %1239 = vmatpush.xpose.msra.mxu0 %v1238
    %v1240 = vand.u32 %v72, 4294901760
    %1241 = vmatmul.f32.gmra.mxu0 %v1240
    %v1242 = vpop.f32.mrf.mxu0
    %v1243 = vadd.f32 %v1221, %v1242
    %1244 = vdwg.mxu0
    %v1245 = vmax.f32 %v1243, 0.0
    %vm1246 = vcmask 57344
    %1247 = vst.msk [vmem:[#allocation8] sm:$0x1] %vm1246, %v1245
    // Predicated region
    $region22: #{tpu_custom_call.1} parent=1 // pred_check
      _
    $region23: #{tpu_custom_call.1} parent=1 // pred_check_branch
      %1249 = sbr.rel (0) target = $region25
    $region24: #{tpu_custom_call.1} parent=1 // pred_region
      %1251 = vsyncadd [#allocation5], 0
      %s1253 = sshll.u32 [#allocation8], 4
      %s1254 = int_to_ptr.vmem [resolvable:$true] %s1253
      %s1255 = sshll.u32 %s3, 4
      %s1256 = int_to_ptr.hbm [resolvable:$true] %s1255
      %1258 = dma.vmem_to_hbm [thread:$0]  %s1254, 16, %s1256, [#allocation5]
    $region25: #{tpu_custom_call.1} parent=1 // pred_fallthru
      _
    // Predicated region
    $region26: #{tpu_custom_call.1} parent=1 // pred_check
      _
    $region27: #{tpu_custom_call.1} parent=1 // pred_check_branch
      %1260 = sbr.rel (0) target = $region29
    $region28: #{tpu_custom_call.1} parent=1 // pred_region
      %1262 = dma.done [#allocation5], 16
    $region29: #{tpu_custom_call.1} parent=1 // pred_fallthru
      _
    %1263 = vsyncpa [#allocation4], 1
    %1264 = vsyncpa [#allocation7], 1
    %1265 = vsyncpa [#allocation5], 1

</llo_original>
